<compile_context>
chip_gen: v7x
topology: tpu7x:2x2x1
jax: 0.10.0
libtpu: 0.0.40
codegen_flags: <defaults>
</compile_context>

<pallas_src>
import jax
import jax.numpy as jnp
from jax.experimental import pallas as pl
from jax.experimental.pallas import tpu as pltpu

TILE_M = 2048  # lanes per output tile (multiple of 128); tiny VMEM footprint


def _conv1x1_fused_kernel(x_ref, w_ref, b_ref, o_ref):
    # x_ref: (Cin, TM), w_ref: (Cout, Cin), b_ref: (Cout, 1), o_ref: (Cout, TM)
    x = x_ref[...]
    w = w_ref[...]
    cin = w.shape[1]

    # Cin-step outer-product accumulation on the VPU (no MXU for K=3).
    acc = w[:, 0:1] * x[0:1, :]
    for c in range(1, cin):
        acc = acc + w[:, c:c + 1] * x[c:c + 1, :]

    y = acc + b_ref[...]               # conv output (t1 == t2)
    t3 = y + 3.0                       # t3 = t2 + 3
    t4 = y + t3                        # t4 = t1 + t3
    t5 = jnp.maximum(t4, 0.0)          # t5 = clamp_min(t4, 0)
    o_ref[...] = (t3 * t5).astype(o_ref.dtype)  # t6 = t3 * t5


def model_forward(x_nchw, weight, bias):
    """x_nchw: (N, Cin, H, W) f32; weight: (Cout, Cin); bias: (Cout,)."""
    N, Cin, H, W = x_nchw.shape
    Cout = weight.shape[0]
    Ho = (H - 1) // 2 + 1              # ceil(H/2): matches Conv2d(k=1, s=2, p=0)
    Wo = (W - 1) // 2 + 1
    M = Ho * Wo

    # stride-2 subsample; collapsing (Ho, Wo) -> M is a free reshape (no transpose).
    # TODO(synk): the stride-2 slice itself is still a small XLA op; it could be
    # fused into the kernel's input DMA with a strided index_map if needed.
    xs = x_nchw[:, :, ::2, ::2].reshape(N, Cin, M).astype(jnp.float32)
    w = weight.astype(jnp.float32)                 # (Cout, Cin)
    b = bias.reshape(Cout, 1).astype(jnp.float32)  # (Cout, 1)

    tm = M if M < TILE_M else TILE_M               # full dim or multiple of 128
    grid = (N, pl.cdiv(M, tm))

    out_flat = pl.pallas_call(
        _conv1x1_fused_kernel,
        out_shape=jax.ShapeDtypeStruct((N, Cout, M), jnp.float32),
        grid_spec=pl.GridSpec(
            grid=grid,
            in_specs=[
                pl.BlockSpec((None, Cin, tm), lambda n, m: (n, 0, m)),
                pl.BlockSpec((Cout, Cin), lambda n, m: (0, 0)),   # resident
                pl.BlockSpec((Cout, 1), lambda n, m: (0, 0)),     # resident
            ],
            out_specs=pl.BlockSpec((None, Cout, tm), lambda n, m: (n, 0, m)),
        ),
        compiler_params=pltpu.CompilerParams(
            dimension_semantics=("parallel", "parallel")),
    )(xs, w, b)

    return out_flat.reshape(N, Cout, Ho, Wo)


def reference_forward(x_nchw, weight, bias):
    """Pure-JAX reference matching the PyTorch semantics."""
    xs = x_nchw[:, :, ::2, ::2]
    y = jnp.einsum("ncij,oc->noij", xs, weight) + bias[None, :, None, None]
    t1 = y
    t3 = y + 3.0
    t4 = t1 + t3
    t5 = jnp.maximum(t4, 0.0)
    return t3 * t5


if __name__ == "__main__":
    key = jax.random.PRNGKey(0)
    kx, kw, kb = jax.random.split(key, 3)

    # Small shapes consistent with the module: Cin=3, Cout=32, spatial=16.
    N, Cin, H, W = 2, 3, 16, 16
    Cout = 32

    x = jax.random.normal(kx, (N, Cin, H, W), dtype=jnp.float32)
    # Conv2d(3, 32, 1) parameters: weight (32, 3), bias (32,)
    weight = jax.random.normal(kw, (Cout, Cin), dtype=jnp.float32) * 0.1
    bias = jax.random.normal(kb, (Cout,), dtype=jnp.float32) * 0.1

    out = model_forward(x, weight, bias)
    out = jax.block_until_ready(out)

    ref = reference_forward(x, weight, bias)
    assert out.shape == (N, Cout, (H + 1) // 2, (W + 1) // 2), out.shape
    assert jnp.allclose(out, ref, atol=1e-4, rtol=1e-4), "mismatch vs reference"

    print("KERNEL_OK")
</pallas_src>

<mosaic_0001>
module attributes {stable_mosaic.version = 11 : i64} {
  func.func @_conv1x1_fused_kernel(%arg0: i32, %arg1: i32, %arg2: memref<1x3x64xf32, #tpu.memory_space<vmem>>, %arg3: memref<32x3xf32, #tpu.memory_space<vmem>>, %arg4: memref<32x1xf32, #tpu.memory_space<vmem>>, %arg5: memref<1x32x64xf32, #tpu.memory_space<vmem>>) attributes {dimension_semantics = [#tpu.dimension_semantics<parallel>, #tpu.dimension_semantics<parallel>], iteration_bounds = array<i64: 2, 1>, scalar_prefetch = 0 : i64, scratch_operands = 0 : i64, tpu.core_type = #tpu.core_type<tc>, window_params = [{transform_indices = @transform_0, window_bounds = array<i64: 1, 3, 64>}, {pipeline_mode = #tpu.pipeline_mode<synchronous>, transform_indices = @transform_1, window_bounds = array<i64: 32, 3>}, {pipeline_mode = #tpu.pipeline_mode<synchronous>, transform_indices = @transform_2, window_bounds = array<i64: 32, 1>}, {transform_indices = @transform_3, window_bounds = array<i64: 1, 32, 64>}]} {
    %c0 = arith.constant 0 : index
    %c0_0 = arith.constant 0 : index
    %c0_1 = arith.constant 0 : index
    %0 = vector.load %arg2[%c0, %c0_0, %c0_1] : memref<1x3x64xf32, #tpu.memory_space<vmem>>, vector<1x3x64xf32>
    %1 = vector.shape_cast %0 : vector<1x3x64xf32> to vector<3x64xf32>
    %c0_2 = arith.constant 0 : index
    %c0_3 = arith.constant 0 : index
    %2 = vector.load %arg3[%c0_2, %c0_3] : memref<32x3xf32, #tpu.memory_space<vmem>>, vector<32x3xf32>
    %3 = vector.extract_strided_slice %2 {offsets = [0, 0], sizes = [32, 1], strides = [1, 1]} : vector<32x3xf32> to vector<32x1xf32>
    %4 = vector.extract_strided_slice %1 {offsets = [0, 0], sizes = [1, 64], strides = [1, 1]} : vector<3x64xf32> to vector<1x64xf32>
    %5 = vector.broadcast %3 : vector<32x1xf32> to vector<32x64xf32>
    %6 = vector.broadcast %4 : vector<1x64xf32> to vector<32x64xf32>
    %7 = arith.mulf %5, %6 : vector<32x64xf32>
    %8 = vector.extract_strided_slice %2 {offsets = [0, 1], sizes = [32, 1], strides = [1, 1]} : vector<32x3xf32> to vector<32x1xf32>
    %9 = vector.extract_strided_slice %1 {offsets = [1, 0], sizes = [1, 64], strides = [1, 1]} : vector<3x64xf32> to vector<1x64xf32>
    %10 = vector.broadcast %8 : vector<32x1xf32> to vector<32x64xf32>
    %11 = vector.broadcast %9 : vector<1x64xf32> to vector<32x64xf32>
    %12 = arith.mulf %10, %11 : vector<32x64xf32>
    %13 = arith.addf %7, %12 : vector<32x64xf32>
    %14 = vector.extract_strided_slice %2 {offsets = [0, 2], sizes = [32, 1], strides = [1, 1]} : vector<32x3xf32> to vector<32x1xf32>
    %15 = vector.extract_strided_slice %1 {offsets = [2, 0], sizes = [1, 64], strides = [1, 1]} : vector<3x64xf32> to vector<1x64xf32>
    %16 = vector.broadcast %14 : vector<32x1xf32> to vector<32x64xf32>
    %17 = vector.broadcast %15 : vector<1x64xf32> to vector<32x64xf32>
    %18 = arith.mulf %16, %17 : vector<32x64xf32>
    %19 = arith.addf %13, %18 : vector<32x64xf32>
    %c0_4 = arith.constant 0 : index
    %c0_5 = arith.constant 0 : index
    %20 = vector.load %arg4[%c0_4, %c0_5] : memref<32x1xf32, #tpu.memory_space<vmem>>, vector<32x1xf32>
    %21 = vector.broadcast %20 : vector<32x1xf32> to vector<32x64xf32>
    %22 = arith.addf %19, %21 : vector<32x64xf32>
    %cst = arith.constant 3.000000e+00 : f32
    %23 = vector.broadcast %cst : f32 to vector<32x64xf32>
    %24 = arith.addf %22, %23 : vector<32x64xf32>
    %25 = arith.addf %22, %24 : vector<32x64xf32>
    %cst_6 = arith.constant 0.000000e+00 : f32
    %26 = vector.broadcast %cst_6 : f32 to vector<32x64xf32>
    %27 = arith.maximumf %25, %26 : vector<32x64xf32>
    %28 = arith.mulf %24, %27 : vector<32x64xf32>
    %c0_7 = arith.constant 0 : index
    %c0_8 = arith.constant 0 : index
    %c0_9 = arith.constant 0 : index
    %29 = vector.load %arg5[%c0_7, %c0_8, %c0_9] : memref<1x32x64xf32, #tpu.memory_space<vmem>>, vector<1x32x64xf32>
    %30 = vector.shape_cast %29 : vector<1x32x64xf32> to vector<32x64xf32>
    %31 = vector.shape_cast %28 : vector<32x64xf32> to vector<1x32x64xf32>
    tpu.vector_store %arg5[%c0_7, %c0_8, %c0_9], %31 {strides = array<i32>} : memref<1x32x64xf32, #tpu.memory_space<vmem>>, vector<1x32x64xf32>,
    return
  }
  func.func @transform_0(%arg0: i32, %arg1: i32) -> (i32, i32, i32) {
    %c0_i32 = arith.constant 0 : i32
    %c0_i32_0 = arith.constant 0 : i32
    return %arg0, %c0_i32, %arg1 : i32, i32, i32
  }
  func.func @transform_1(%arg0: i32, %arg1: i32) -> (i32, i32) {
    %c0_i32 = arith.constant 0 : i32
    %c0_i32_0 = arith.constant 0 : i32
    %c0_i32_1 = arith.constant 0 : i32
    return %c0_i32, %c0_i32_0 : i32, i32
  }
  func.func @transform_2(%arg0: i32, %arg1: i32) -> (i32, i32) {
    %c0_i32 = arith.constant 0 : i32
    %c0_i32_0 = arith.constant 0 : i32
    %c0_i32_1 = arith.constant 0 : i32
    return %c0_i32, %c0_i32_0 : i32, i32
  }
  func.func @transform_3(%arg0: i32, %arg1: i32) -> (i32, i32, i32) {
    %c0_i32 = arith.constant 0 : i32
    %c0_i32_0 = arith.constant 0 : i32
    return %arg0, %c0_i32, %arg1 : i32, i32, i32
  }
}

</mosaic_0001>

<llo_original>
// kernel: tpu_custom_call.1
$region0: #{tpu_custom_call.1}
  #allocation0 [shape = 'u32[]', space=smem, size = 0x4, offset = 0x4, fixed_abs, tag = 'smem constant byte address 0x4 - core index']
  #allocation1 [shape = 'u32[144,128]{1,0:T(1,128)}', space=vmem, size = 0x12000, scoped, tag = 'internal scratch']
  %s0 = inlined_call_operand.vmem [shape: f32[2,3,64], index: 0, kind: input, shape index: {}]
  %s1 = inlined_call_operand.vmem [shape: f32[32,3], index: 1, kind: input, shape index: {}]
  %s2 = inlined_call_operand.vmem [shape: f32[32,1], index: 2, kind: input, shape index: {}]
  %s3 = inlined_call_operand.hbm [shape: f32[2,32,64], index: 3, kind: output, shape index: {}]
  %s4 = sld [smem:[#allocation0]]
  $region45: #{tpu_custom_call.1} parent=0
    _
  %s6 = ssub.s32 1, %s4
  %s7 = scalar_select 0, %s6, %s4
  $region1: #{tpu_custom_call.1} parent=0
    #allocation2 [shape = 'u8[32768]{0}', space=vmem, size = 0x8000, scoped, tag = 'output window, operand 0']
    #allocation3 [shape = 's32[2]{0}', space=sflag, size = 0x8, scoped, tag = 'scoped memory for tpu_custom_call.1']
    %8 = vsyncpa [#allocation3], 0
    %s9 = scalar_lea.sflag [#allocation3], 1
    %10 = vsyncpa %s9, 0
    loop: start=0, step=1, limit=4
    $region2: #{tpu_custom_call.1} parent=1 // loop_pre_header
      _
    $region3: #{tpu_custom_call.1} parent=1 // loop_header
      %s12 = sphi 0, %s16
      %p13 = scmp.ge.s32.totalorder %s12, 4
      %s19 = sphi 0, %s31
      %s20 = sphi 0, %s27
      %s21 = sphi 0, %s19
      %s22 = sphi 0, %s20
      %s23 = sphi 0, %s21
      %s24 = sphi 0, %s22
      %s36 = sphi 0, %s38
      %s39 = sphi 0, %s36
      %s40 = sphi 0, %s39
      %s56 = sphi 0, %s40
      %s60 = sphi 0, %s60
      %s62 = sphi 0, %s60
      %s63 = sphi 0, %s62
      %s77 = sphi 0, %s63
      %s81 = sphi 0, %s81
      %s83 = sphi 0, %s81
      %s84 = sphi 0, %s83
      %s98 = sphi 0, %s84
      %s106 = sphi 0, %s108
      %s109 = sphi 0, %s106
      %s110 = sphi 0, %s109
      %s126 = sphi 0, %s110
    $region4: #{tpu_custom_call.1} parent=1 // loop_header_branch
      %15 = sbr.rel (%p13) target = $region8
    $region5: #{tpu_custom_call.1} parent=1 // loop_body
      %s17 = ssub.s32 %s12, 1
      %s18 = ssub.s32 %s12, 2
      %s25 = sadd.s32 1, %s20
      %p26 = scmp.ge.s32.totalorder %s25, 1
      %s27 = scalar_select %p26, 0, %s25
      %s28 = sadd.s32 1, %s19
      %s29 = scalar_select %p26, %s28, %s19
      %p30 = scmp.ge.s32.totalorder %s29, 2
      %s31 = scalar_select %p30, 0, %s29
      %s32 = ssub.s32 %s19, %s31
      %s33 = ssub.s32 %s20, %s27
      %s34 = sor.u32 %s32, %s33
      %p35 = scmp.eq.s32.totalorder %s34, 0
      %s37 = sadd.s32 %s36, 1
      %s38 = scalar_select %p35, %s36, %s37
      %p41 = pneg %p35
      %p42 = scmp.eq.s32.totalorder %s12, 1
      %p43 = por %p41, %p42
      %p44 = scmp.ne.s32.totalorder %s36, %s39
      %p45 = scmp.eq.s32.totalorder %s12, 0
      %p46 = por %p44, %p45
      %p47 = scmp.ne.s32.totalorder %s36, %s39
      %p48 = scmp.eq.s32.totalorder %s17, 1
      %p49 = por %p47, %p48
      %p50 = scmp.ne.s32.totalorder %s39, %s40
      %p51 = scmp.eq.s32.totalorder %s17, 0
      %p52 = por %p50, %p51
      %p53 = scmp.ne.s32.totalorder %s39, %s40
      %p54 = scmp.eq.s32.totalorder %s18, 1
      %p55 = por %p53, %p54
      %p57 = scmp.ne.s32.totalorder %s40, %s56
      %p58 = scmp.eq.s32.totalorder %s18, 0
      %p59 = por %p57, %p58
      %s61 = sadd.s32 %s60, 1
      %p64 = scmp.eq.s32.totalorder %s12, 1
      %p65 = scmp.ne.s32.totalorder %s60, %s62
      %p66 = scmp.eq.s32.totalorder %s12, 0
      %p67 = por %p65, %p66
      %p68 = scmp.ne.s32.totalorder %s60, %s62
      %p69 = scmp.eq.s32.totalorder %s17, 1
      %p70 = por %p68, %p69
      %p71 = scmp.ne.s32.totalorder %s62, %s63
      %p72 = scmp.eq.s32.totalorder %s17, 0
      %p73 = por %p71, %p72
      %p74 = scmp.ne.s32.totalorder %s62, %s63
      %p75 = scmp.eq.s32.totalorder %s18, 1
      %p76 = por %p74, %p75
      %p78 = scmp.ne.s32.totalorder %s63, %s77
      %p79 = scmp.eq.s32.totalorder %s18, 0
      %p80 = por %p78, %p79
      %s82 = sadd.s32 %s81, 1
      %p85 = scmp.eq.s32.totalorder %s12, 1
      %p86 = scmp.ne.s32.totalorder %s81, %s83
      %p87 = scmp.eq.s32.totalorder %s12, 0
      %p88 = por %p86, %p87
      %p89 = scmp.ne.s32.totalorder %s81, %s83
      %p90 = scmp.eq.s32.totalorder %s17, 1
      %p91 = por %p89, %p90
      %p92 = scmp.ne.s32.totalorder %s83, %s84
      %p93 = scmp.eq.s32.totalorder %s17, 0
      %p94 = por %p92, %p93
      %p95 = scmp.ne.s32.totalorder %s83, %s84
      %p96 = scmp.eq.s32.totalorder %s18, 1
      %p97 = por %p95, %p96
      %p99 = scmp.ne.s32.totalorder %s84, %s98
      %p100 = scmp.eq.s32.totalorder %s18, 0
      %p101 = por %p99, %p100
      %s102 = ssub.s32 %s19, %s31
      %s103 = ssub.s32 %s20, %s27
      %s104 = sor.u32 %s102, %s103
      %p105 = scmp.eq.s32.totalorder %s104, 0
      %s107 = sadd.s32 %s106, 1
      %s108 = scalar_select %p105, %s106, %s107
      %p111 = pneg %p105
      %p112 = scmp.eq.s32.totalorder %s12, 1
      %p113 = por %p111, %p112
      %p114 = scmp.ne.s32.totalorder %s106, %s109
      %p115 = scmp.eq.s32.totalorder %s12, 0
      %p116 = por %p114, %p115
      %p117 = scmp.ne.s32.totalorder %s106, %s109
      %p118 = scmp.eq.s32.totalorder %s17, 1
      %p119 = por %p117, %p118
      %p120 = scmp.ne.s32.totalorder %s109, %s110
      %p121 = scmp.eq.s32.totalorder %s17, 0
      %p122 = por %p120, %p121
      %p123 = scmp.ne.s32.totalorder %s109, %s110
      %p124 = scmp.eq.s32.totalorder %s18, 1
      %p125 = por %p123, %p124
      %p127 = scmp.ne.s32.totalorder %s110, %s126
      %p128 = scmp.eq.s32.totalorder %s18, 0
      %p129 = por %p127, %p128
      %p130 = scmp.le.s32.totalorder 1, %s12
      %p131 = scmp.lt.s32.totalorder %s12, 3
      %p132 = pnand %p130, %p131
      %p133 = pneg %p132
      // Predicated region
      $region9: #{tpu_custom_call.1} parent=5 // pred_check
        _
      $region10: #{tpu_custom_call.1} parent=5 // pred_check_branch
        %135 = sbr.rel (%p132) target = $region12
      $region11: #{tpu_custom_call.1} parent=5 // pred_region
        %s136 = ssub.s32 %s12, 1
        // Predicated region
        $region13: #{tpu_custom_call.1} parent=11 // pred_check
          %p137 = pneg %p73
        $region14: #{tpu_custom_call.1} parent=11 // pred_check_branch
          %139 = sbr.rel (%p137) target = $region16
        $region15: #{tpu_custom_call.1} parent=11 // pred_region
          _
        $region16: #{tpu_custom_call.1} parent=11 // pred_fallthru
          _
        // Predicated region
        $region17: #{tpu_custom_call.1} parent=11 // pred_check
          %p140 = pneg %p94
        $region18: #{tpu_custom_call.1} parent=11 // pred_check_branch
          %142 = sbr.rel (%p140) target = $region20
        $region19: #{tpu_custom_call.1} parent=11 // pred_region
          _
        $region20: #{tpu_custom_call.1} parent=11 // pred_fallthru
          _
      $region12: #{tpu_custom_call.1} parent=5 // pred_fallthru
        _
      %p143 = scmp.lt.s32.totalorder %s12, 2
      // Predicated region
      $region21: #{tpu_custom_call.1} parent=5 // pred_check
        %p144 = pneg %p143
      $region22: #{tpu_custom_call.1} parent=5 // pred_check_branch
        %146 = sbr.rel (%p144) target = $region24
      $region23: #{tpu_custom_call.1} parent=5 // pred_region
        // Predicated region
        $region25: #{tpu_custom_call.1} parent=23 // pred_check
          %p147 = pneg %p46
        $region26: #{tpu_custom_call.1} parent=23 // pred_check_branch
          %149 = sbr.rel (%p147) target = $region28
        $region27: #{tpu_custom_call.1} parent=23 // pred_region
          %p150 = scmp.lt.s32.totalorder %s19, 1
          %s151 = scalar_select %p150, %s19, 1
          %p152 = scmp.lt.s32.totalorder %s20, 0
          %s153 = scalar_select %p152, %s20, 0
          %s154 = sadd.s32 %s153, %s151
          %s155 = smul.addr %s154, 4
          %s156 = scalar_lea.vmem %s0, %s155
        $region28: #{tpu_custom_call.1} parent=23 // pred_fallthru
          _
      $region24: #{tpu_custom_call.1} parent=5 // pred_fallthru
        _
      %p157 = scmp.le.s32.totalorder 1, %s12
      %p158 = scmp.lt.s32.totalorder %s12, 3
      %p159 = pnand %p157, %p158
      %p160 = pneg %p159
      // Predicated region
      $region29: #{tpu_custom_call.1} parent=5 // pred_check
        _
      $region30: #{tpu_custom_call.1} parent=5 // pred_check_branch
        %162 = sbr.rel (%p159) target = $region32
      $region31: #{tpu_custom_call.1} parent=5 // pred_region
        %s163 = ssub.s32 %s12, 1
        %p164 = scmp.lt.s32.totalorder %s21, 1
        %s165 = scalar_select %p164, %s21, 1
        %p166 = scmp.lt.s32.totalorder %s22, 0
        %s167 = scalar_select %p166, %s22, 0
        %s168 = sadd.s32 %s167, %s165
        %s169 = smul.addr %s168, 4
        %s170 = scalar_lea.vmem %s0, %s169
        %p171 = pneg %p52
        %p172 = pneg %p49
        %p173 = pneg %p73
        %p174 = pneg %p70
        %p175 = pneg %p94
        %p176 = pneg %p91
        %p177 = pneg %p122
        %p178 = pneg %p119
        %s179 = sand.u32 %s109, 1
        %s180 = scalar_lea.sflag [#allocation3], %s179
        %s181 = sand.u32 %s109, 1
        %s182 = smul.addr %s181, 32
        %s183 = scalar_lea.vmem [#allocation2], %s182
        %p184 = scmp.lt.s32.totalorder %s21, 1
        %s185 = scalar_select %p184, %s21, 1
        %p186 = scmp.lt.s32.totalorder %s22, 0
        %s187 = scalar_select %p186, %s22, 0
        %s188 = sadd.s32 %s187, %s185
        %s189 = smul.addr %s188, 4
        %s190 = scalar_lea.vmem %s0, %s189
        %v191 = vld [vmem:[%s190] sm:$0x7]
        %v192 = vld [vmem:[%s1] sm:$0xff]
        %v193 = vld [vmem:[%s1 + $0x8] sm:$0xff]
        %v194 = vld [vmem:[%s1 + $0x10] sm:$0xff]
        %v195 = vld [vmem:[%s1 + $0x18] sm:$0xff]
        %197 = vset.pattern.permute.xlu0 0
        %198 = vperm.xlu0 %197, %v192
        %v199 = vpop.permute.xlu0 %198
        %202 = vset.pattern.permute.xlu0 0
        %203 = vperm.xlu0 %202, %v193
        %v204 = vpop.permute.xlu0 %203
        %207 = vset.pattern.permute.xlu0 0
        %208 = vperm.xlu0 %207, %v194
        %v209 = vpop.permute.xlu0 %208
        %212 = vset.pattern.permute.xlu0 0
        %213 = vperm.xlu0 %212, %v195
        %v214 = vpop.permute.xlu0 %213
        %v216 = vlaneseq
        %v217 = vshrl.u32 %v216, 7
        %v218 = vsub.s32 0, %v217
        %v219 = vrot.slane %v191, %v218
        %v220 = vmul.f32 %v199, %v219
        %v221 = vmul.f32 %v204, %v219
        %v222 = vmul.f32 %v209, %v219
        %v223 = vmul.f32 %v214, %v219
        %224 = vset.pattern.permute.xlu0 1
        %225 = vperm.xlu0 %224, %v192
        %v226 = vpop.permute.xlu0 %225
        %228 = vset.pattern.permute.xlu0 1
        %229 = vperm.xlu0 %228, %v193
        %v230 = vpop.permute.xlu0 %229
        %232 = vset.pattern.permute.xlu0 1
        %233 = vperm.xlu0 %232, %v194
        %v234 = vpop.permute.xlu0 %233
        %236 = vset.pattern.permute.xlu0 1
        %237 = vperm.xlu0 %236, %v195
        %v238 = vpop.permute.xlu0 %237
        %v240 = vlaneseq
        %v241 = vshrl.u32 %v240, 7
        %v242 = vsub.s32 1, %v241
        %v243 = vrot.slane %v191, %v242
        %v244 = vmul.f32 %v226, %v243
        %v245 = vmul.f32 %v230, %v243
        %v246 = vmul.f32 %v234, %v243
        %v247 = vmul.f32 %v238, %v243
        %v248 = vadd.f32 %v220, %v244
        %v249 = vadd.f32 %v221, %v245
        %v250 = vadd.f32 %v222, %v246
        %v251 = vadd.f32 %v223, %v247
        %252 = vset.pattern.permute.xlu0 2
        %253 = vperm.xlu0 %252, %v192
        %v254 = vpop.permute.xlu0 %253
        %256 = vset.pattern.permute.xlu0 2
        %257 = vperm.xlu0 %256, %v193
        %v258 = vpop.permute.xlu0 %257
        %260 = vset.pattern.permute.xlu0 2
        %261 = vperm.xlu0 %260, %v194
        %v262 = vpop.permute.xlu0 %261
        %264 = vset.pattern.permute.xlu0 2
        %265 = vperm.xlu0 %264, %v195
        %v266 = vpop.permute.xlu0 %265
        %v268 = vlaneseq
        %v269 = vshrl.u32 %v268, 7
        %v270 = vsub.s32 2, %v269
        %v271 = vrot.slane %v191, %v270
        %v272 = vmul.f32 %v254, %v271
        %v273 = vmul.f32 %v258, %v271
        %v274 = vmul.f32 %v262, %v271
        %v275 = vmul.f32 %v266, %v271
        %v276 = vadd.f32 %v248, %v272
        %v277 = vadd.f32 %v249, %v273
        %v278 = vadd.f32 %v250, %v274
        %v279 = vadd.f32 %v251, %v275
        %v280 = vld [vmem:[%s2] sm:$0xff]
        %v281 = vld [vmem:[%s2 + $0x8] sm:$0xff]
        %v282 = vld [vmem:[%s2 + $0x10] sm:$0xff]
        %v283 = vld [vmem:[%s2 + $0x18] sm:$0xff]
        %285 = vset.pattern.permute.xlu0 0
        %286 = vperm.xlu0 %285, %v280
        %v287 = vpop.permute.xlu0 %286
        %290 = vset.pattern.permute.xlu0 0
        %291 = vperm.xlu0 %290, %v281
        %v292 = vpop.permute.xlu0 %291
        %295 = vset.pattern.permute.xlu0 0
        %296 = vperm.xlu0 %295, %v282
        %v297 = vpop.permute.xlu0 %296
        %300 = vset.pattern.permute.xlu0 0
        %301 = vperm.xlu0 %300, %v283
        %v302 = vpop.permute.xlu0 %301
        %v304 = vadd.f32 %v276, %v287
        %v305 = vadd.f32 %v277, %v292
        %v306 = vadd.f32 %v278, %v297
        %v307 = vadd.f32 %v279, %v302
        %v308 = vadd.f32 %v304, 3.0
        %v309 = vadd.f32 %v305, 3.0
        %v310 = vadd.f32 %v306, 3.0
        %v311 = vadd.f32 %v307, 3.0
        %v312 = vadd.f32 %v304, %v308
        %v313 = vadd.f32 %v305, %v309
        %v314 = vadd.f32 %v306, %v310
        %v315 = vadd.f32 %v307, %v311
        %v316 = vmax.f32 %v312, 0.0
        %v317 = vmax.f32 %v313, 0.0
        %v318 = vmax.f32 %v314, 0.0
        %v319 = vmax.f32 %v315, 0.0
        %v320 = vmul.f32 %v308, %v316
        %v321 = vmul.f32 %v309, %v317
        %v322 = vmul.f32 %v310, %v318
        %v323 = vmul.f32 %v311, %v319
        %vm324 = vcmask 523264
        %325 = vst.msk [vmem:[%s183] sm:$0xff] %vm324, %v320
        %326 = vst.msk [vmem:[%s183 + $0x8] sm:$0xff] %vm324, %v321
        %327 = vst.msk [vmem:[%s183 + $0x10] sm:$0xff] %vm324, %v322
        %328 = vst.msk [vmem:[%s183 + $0x18] sm:$0xff] %vm324, %v323
        %s329 = sand.u32 %s109, 1
        %s330 = scalar_lea.sflag [#allocation3], %s329
        %s331 = sand.u32 %s109, 1
        %s332 = smul.addr %s331, 32
        %s333 = scalar_lea.vmem [#allocation2], %s332
        // Predicated region
        $region33: #{tpu_custom_call.1} parent=31 // pred_check
          %p334 = pneg %p119
        $region34: #{tpu_custom_call.1} parent=31 // pred_check_branch
          %336 = sbr.rel (%p334) target = $region36
        $region35: #{tpu_custom_call.1} parent=31 // pred_region
          %s338 = ssub.s32 512, 512
          %339 = vsyncadd %s330, %s338
          %s340 = smul.addr %s21, 4
          %s341 = sadd.s32 %s22, %s340
          %s342 = smul.addr %s341, 128
          %s343 = scalar_lea.hbm %s3, %s342
          %s344 = sshll.u32 %s333, 4
          %s345 = int_to_ptr.vmem [resolvable:$true] %s344
          %350 = dma.vmem_to_hbm [thread:$0]  %s345, 512, %s343, %s330, 128, 128, 8
        $region36: #{tpu_custom_call.1} parent=31 // pred_fallthru
          _
      $region32: #{tpu_custom_call.1} parent=5 // pred_fallthru
        _
      %p351 = scmp.le.s32.totalorder 2, %s12
      // Predicated region
      $region37: #{tpu_custom_call.1} parent=5 // pred_check
        %p352 = pneg %p351
      $region38: #{tpu_custom_call.1} parent=5 // pred_check_branch
        %354 = sbr.rel (%p352) target = $region40
      $region39: #{tpu_custom_call.1} parent=5 // pred_region
        %s355 = ssub.s32 %s12, 2
        // Predicated region
        $region41: #{tpu_custom_call.1} parent=39 // pred_check
          %p356 = pneg %p125
        $region42: #{tpu_custom_call.1} parent=39 // pred_check_branch
          %358 = sbr.rel (%p356) target = $region44
        $region43: #{tpu_custom_call.1} parent=39 // pred_region
          %s359 = sand.u32 %s110, 1
          %s360 = scalar_lea.sflag [#allocation3], %s359
          %s361 = sand.u32 %s110, 1
          %s362 = smul.addr %s361, 32
          %s363 = scalar_lea.vmem [#allocation2], %s362
          %364 = dma.done %s360, 512
        $region44: #{tpu_custom_call.1} parent=39 // pred_fallthru
          _
      $region40: #{tpu_custom_call.1} parent=5 // pred_fallthru
        _
    $region6: #{tpu_custom_call.1} parent=1 // loop_footer
      %s16 = sadd.s32 1, %s12
    $region7: #{tpu_custom_call.1} parent=1 // loop_footer_branch
      %11 = sbr.rel target = $region3
    $region8: #{tpu_custom_call.1} parent=1 // loop_exit
      _
    %365 = vsyncpa [#allocation3], 1
    %s366 = scalar_lea.sflag [#allocation3], 1
    %367 = vsyncpa %s366, 1

</llo_original>
